<compile_context>
chip_gen: v5e
topology: v5e:2x2
jax: 0.10.0
libtpu: 0.0.40
codegen_flags: <defaults>
</compile_context>

<pallas_src>
import functools

import jax
import jax.numpy as jnp
from jax.experimental import pallas as pl
from jax.experimental.pallas import tpu as pltpu


def _round_up(x, m):
    return ((x + m - 1) // m) * m


def _choose_tm(m):
    """Pick the M-tile (row-tile) size.

    Big tiles (up to 1024 rows) amortize the ~0.35 us per-grid-step overhead of
    this HBM-bound GEMM while keeping the double-buffered working set
    (~9 MiB at K=384, N_pad=768) under v5e's 16 MiB default scoped-VMEM limit.
    For small/medium M we split into exactly two tiles so v7x's second
    TensorCore gets work via dimension_semantics=("parallel",).
    """
    m8 = _round_up(max(m, 1), 8)
    if m8 <= 8:
        return m8                               # tiny: single tile
    if m8 <= 2 * 1024:
        return _round_up(pl.cdiv(m8, 2), 8)     # exactly 2 tiles (megacore balance)
    return 1024                                 # >= 3 tiles; ragged tail is fine


def _patch_embed_kernel(x_ref, w_ref, b_ref, o_ref):
    # x_ref: (TM, K) bf16, w_ref: (K, N_pad) bf16, b_ref: (1, N_pad) f32,
    # o_ref: (TM, N_pad) f32
    acc = jnp.dot(x_ref[...], w_ref[...], preferred_element_type=jnp.float32)
    o_ref[...] = (acc + b_ref[...]).astype(o_ref.dtype)


def patch_embed_pallas(x_bf16, w_pad_bf16, bias_pad_f32, *, out_dtype=jnp.float32):
    """out = x @ w + bias, row-tiled, bf16 operands on the MXU, fp32 accumulate.

    `w_pad_bf16` / `bias_pad_f32` must already be padded to a lane-dense N_pad
    (multiple of 128); the caller slices the output back to the valid columns.
    """
    M, K = x_bf16.shape
    K2, n_pad = w_pad_bf16.shape
    assert K == K2 and bias_pad_f32.shape == (1, n_pad) and n_pad % 128 == 0
    assert x_bf16.dtype == jnp.bfloat16 and w_pad_bf16.dtype == jnp.bfloat16

    tm = _choose_tm(M)
    grid = (pl.cdiv(M, tm),)   # ragged last tile handled by Pallas (no jnp.pad pass)

    cost = pl.CostEstimate(
        flops=2 * M * K * n_pad,
        transcendentals=0,
        bytes_accessed=(M * K * 2 + K * n_pad * 2
                        + M * n_pad * jnp.dtype(out_dtype).itemsize + n_pad * 4),
    )

    # TODO(synk): optionally emit bf16 output (out_dtype=jnp.bfloat16) if the
    # downstream transformer accepts bf16 activations -- the f32 output write is
    # ~80% of the kernel's HBM bytes per row.
    # TODO(synk): evaluate allow_input_fusion on operand 0 so the 9-D
    # cast+transpose producer fuses into the pallas_call and X never hits HBM;
    # needs a profile / lower_as_mlir check that XLA actually fuses it.
    out = pl.pallas_call(
        _patch_embed_kernel,
        out_shape=jax.ShapeDtypeStruct((M, n_pad), out_dtype),
        grid_spec=pl.GridSpec(
            grid=grid,
            in_specs=[
                pl.BlockSpec((tm, K), lambda i: (i, 0)),      # X: streamed row tiles
                pl.BlockSpec((K, n_pad), lambda i: (0, 0)),   # W: resident
                pl.BlockSpec((1, n_pad), lambda i: (0, 0)),   # bias: resident
            ],
            out_specs=pl.BlockSpec((tm, n_pad), lambda i: (i, 0)),
        ),
        compiler_params=pltpu.CompilerParams(
            # Independent M tiles -> megacore sharding on v7x, neutral elsewhere.
            dimension_semantics=("parallel",),
        ),
        cost_estimate=cost,
    )(x_bf16, w_pad_bf16, bias_pad_f32)
    return out


def _patchify_impl(imgs, w_pad, bias_pad, *, T, H, W, pT, pH, pW, embed_dim):
    """Jitted forward: fused bf16 cast + patch transpose, Pallas GEMM, reshape."""
    b, v, c, t, h, w = imgs.shape
    # Cast to bf16 BEFORE the transpose so XLA fuses cast+transpose into one
    # pass that writes the patch matrix directly as bf16.
    x = imgs.astype(jnp.bfloat16)
    x = x.reshape(b, v, c, T, pT, H, pH, W, pW)
    x = x.transpose(0, 1, 3, 5, 7, 2, 4, 6, 8)            # b v T H W c pT pH pW
    x = x.reshape(b * v * T * H * W, c * pT * pH * pW)    # (M, K) bf16

    feats = patch_embed_pallas(x, w_pad, bias_pad)         # (M, N_pad) f32
    feats = feats[:, :embed_dim]                           # drop lane padding
    # '(b v) c t h w -> b (v t h w) c' : patch order is already (v, t, h, w).
    return feats.reshape(b, v * T * H * W, embed_dim)


class MultiViewVideoPatchifierPallas:
    """JAX/Pallas port of MultiViewVideoPatchifier (forward == patchify)."""

    def __init__(self, num_views, input_shape=(8, 224, 224),
                 patch_shape=(2, 8, 8), num_chans=3, embed_dim=768, *, key):
        self.num_views = num_views
        iT, iH, iW = input_shape
        pT, pH, pW = patch_shape
        self.T, self.H, self.W = iT // pT, iH // pH, iW // pW
        self.pT, self.pH, self.pW = pT, pH, pW
        self.num_chans = num_chans
        self.embed_dim = embed_dim

        k_w, k_b, k_dw, k_db = jax.random.split(key, 4)
        fan_in = num_chans * pT * pH * pW
        bound = 1.0 / jnp.sqrt(fan_in)
        # Conv3d weight: (out_ch=embed_dim, in_ch=num_chans, pT, pH, pW)
        self.enc_weight = jax.random.uniform(
            k_w, (embed_dim, num_chans, pT, pH, pW),
            minval=-bound, maxval=bound, dtype=jnp.float32)
        self.enc_bias = jax.random.uniform(
            k_b, (embed_dim,), minval=-bound, maxval=bound, dtype=jnp.float32)
        # patch_decoder (nn.Linear) params exist in __init__ but are unused in
        # forward; kept only for parameter parity with the PyTorch module.
        dec_bound = 1.0 / jnp.sqrt(embed_dim)
        self.dec_weight = jax.random.uniform(
            k_dw, (num_chans * pT * pH * pW, embed_dim),
            minval=-dec_bound, maxval=dec_bound, dtype=jnp.float32)
        self.dec_bias = jax.random.uniform(
            k_db, (num_chans * pT * pH * pW,),
            minval=-dec_bound, maxval=dec_bound, dtype=jnp.float32)

        # --- hoisted GEMM operand prep (done once, not per forward) ---------
        # NOTE: both X and W are bf16 on the MXU (fp32 accumulation); this is a
        # deliberate accuracy/speed trade documented by the loosened tolerance.
        K = num_chans * pT * pH * pW
        n_pad = _round_up(embed_dim, 128)                       # lane-dense N
        w_flat = self.enc_weight.reshape(embed_dim, K).T        # (K, N)
        self._w_pad = jnp.pad(
            w_flat, ((0, 0), (0, n_pad - embed_dim))).astype(jnp.bfloat16)
        self._bias_pad = jnp.pad(
            self.enc_bias, (0, n_pad - embed_dim)).reshape(1, n_pad).astype(jnp.float32)

        self._forward = jax.jit(functools.partial(
            _patchify_impl, T=self.T, H=self.H, W=self.W,
            pT=pT, pH=pH, pW=pW, embed_dim=embed_dim))

    @property
    def num_patches(self):
        return self.num_views * self.T * self.H * self.W

    def __call__(self, imgs):
        return self.patchify(imgs)

    def patchify(self, imgs):
        # imgs: (b, v, c, t, h, w) -- PyTorch NCDHW-per-view convention.
        b, v, c, t, h, w = imgs.shape
        assert v == self.num_views and c == self.num_chans
        assert t == self.T * self.pT and h == self.H * self.pH and w == self.W * self.pW
        return self._forward(imgs, self._w_pad, self._bias_pad)


def _reference_patchify(module, imgs):
    """Pure-JAX fp32 reference using lax.conv_general_dilated (mirrors nn.Conv3d)."""
    b, v, c, t, h, w = imgs.shape
    x = imgs.reshape(b * v, c, t, h, w)
    feats = jax.lax.conv_general_dilated(
        x, module.enc_weight,
        window_strides=(module.pT, module.pH, module.pW),
        padding="VALID",
        dimension_numbers=("NCDHW", "OIDHW", "NCDHW"))
    feats = feats + module.enc_bias[None, :, None, None, None]
    # '(b v) c t h w -> b (v t h w) c'
    feats = feats.reshape(b, v, module.embed_dim, module.T, module.H, module.W)
    feats = feats.transpose(0, 1, 3, 4, 5, 2)
    return feats.reshape(b, v * module.T * module.H * module.W, module.embed_dim)


if __name__ == "__main__":
    key = jax.random.PRNGKey(0)
    k_param, k_img = jax.random.split(key)

    # Small but consistent shapes: batch=2, views=2, chans=3,
    # video (t,h,w)=(4,16,16), patch (2,8,8) -> T,H,W = 2,2,2; embed_dim=32.
    batch, num_views, num_chans = 2, 2, 3
    input_shape, patch_shape, embed_dim = (4, 16, 16), (2, 8, 8), 32

    module = MultiViewVideoPatchifierPallas(
        num_views=num_views, input_shape=input_shape, patch_shape=patch_shape,
        num_chans=num_chans, embed_dim=embed_dim, key=k_param)

    imgs = jax.random.normal(
        k_img, (batch, num_views, num_chans, *input_shape), dtype=jnp.float32)

    feats = module(imgs)
    feats = jax.block_until_ready(feats)

    expected_shape = (batch, module.num_patches, embed_dim)
    assert feats.shape == expected_shape, (feats.shape, expected_shape)
    assert feats.dtype == jnp.float32, feats.dtype

    # bf16 operands with fp32 accumulation -> loosen tolerance vs fp32 reference.
    ref = jax.block_until_ready(_reference_patchify(module, imgs))
    assert jnp.allclose(feats, ref, atol=2e-2, rtol=2e-2), \
        float(jnp.max(jnp.abs(feats - ref)))

    print("KERNEL_OK")
</pallas_src>

<mosaic_0001>
module attributes {stable_mosaic.version = 11 : i64} {
  func.func @_patch_embed_kernel(%arg0: i32, %arg1: memref<16x384xbf16, #tpu.memory_space<vmem>>, %arg2: memref<384x128xbf16, #tpu.memory_space<vmem>>, %arg3: memref<1x128xf32, #tpu.memory_space<vmem>>, %arg4: memref<16x128xf32, #tpu.memory_space<vmem>>) attributes {dimension_semantics = [#tpu.dimension_semantics<parallel>], iteration_bounds = array<i64: 2>, scalar_prefetch = 0 : i64, scratch_operands = 0 : i64, tpu.core_type = #tpu.core_type<tc>, window_params = [{transform_indices = @transform_0, window_bounds = array<i64: 16, 384>}, {pipeline_mode = #tpu.pipeline_mode<synchronous>, transform_indices = @transform_1, window_bounds = array<i64: 384, 128>}, {pipeline_mode = #tpu.pipeline_mode<synchronous>, transform_indices = @transform_2, window_bounds = array<i64: 1, 128>}, {transform_indices = @transform_3, window_bounds = array<i64: 16, 128>}]} {
    %c0 = arith.constant 0 : index
    %c0_0 = arith.constant 0 : index
    %0 = vector.load %arg1[%c0, %c0_0] : memref<16x384xbf16, #tpu.memory_space<vmem>>, vector<16x384xbf16>
    %c0_1 = arith.constant 0 : index
    %c0_2 = arith.constant 0 : index
    %1 = vector.load %arg2[%c0_1, %c0_2] : memref<384x128xbf16, #tpu.memory_space<vmem>>, vector<384x128xbf16>
    %cst = arith.constant dense<0.000000e+00> : vector<16x128xf32>
    %2 = tpu.matmul %0, %1, %cst {dimension_numbers = #tpu.dot_dimension_numbers<[1], [0], [0], [1], [0, 0, 1, 1], [], []>} : vector<16x384xbf16>, vector<384x128xbf16>, vector<16x128xf32> -> vector<16x128xf32>
    %c0_3 = arith.constant 0 : index
    %c0_4 = arith.constant 0 : index
    %3 = vector.load %arg3[%c0_3, %c0_4] : memref<1x128xf32, #tpu.memory_space<vmem>>, vector<1x128xf32>
    %4 = vector.broadcast %3 : vector<1x128xf32> to vector<16x128xf32>
    %5 = arith.addf %2, %4 : vector<16x128xf32>
    %c0_5 = arith.constant 0 : index
    %c0_6 = arith.constant 0 : index
    %6 = vector.load %arg4[%c0_5, %c0_6] : memref<16x128xf32, #tpu.memory_space<vmem>>, vector<16x128xf32>
    tpu.vector_store %arg4[%c0_5, %c0_6], %5 {strides = array<i32>} : memref<16x128xf32, #tpu.memory_space<vmem>>, vector<16x128xf32>,
    return
  }
  func.func @transform_0(%arg0: i32) -> (i32, i32) {
    %c0_i32 = arith.constant 0 : i32
    %c0_i32_0 = arith.constant 0 : i32
    return %arg0, %c0_i32 : i32, i32
  }
  func.func @transform_1(%arg0: i32) -> (i32, i32) {
    %c0_i32 = arith.constant 0 : i32
    %c0_i32_0 = arith.constant 0 : i32
    %c0_i32_1 = arith.constant 0 : i32
    return %c0_i32, %c0_i32_0 : i32, i32
  }
  func.func @transform_2(%arg0: i32) -> (i32, i32) {
    %c0_i32 = arith.constant 0 : i32
    %c0_i32_0 = arith.constant 0 : i32
    %c0_i32_1 = arith.constant 0 : i32
    return %c0_i32, %c0_i32_0 : i32, i32
  }
  func.func @transform_3(%arg0: i32) -> (i32, i32) {
    %c0_i32 = arith.constant 0 : i32
    %c0_i32_0 = arith.constant 0 : i32
    return %arg0, %c0_i32 : i32, i32
  }
}

</mosaic_0001>

<llo_original>
// kernel: _patchify_impl.1
$region0: #{_patchify_impl.1}
  #allocation0 [shape = 'u32[]', space=smem, size = 0x4, offset = 0x4, fixed_abs, tag = 'smem constant byte address 0x4 - core index']
  #allocation1 [shape = 'u32[72,128]{1,0:T(1,128)}', space=vmem, size = 0x9000, scoped, tag = 'internal scratch']
  %s0 = inlined_call_operand.vmem [shape: bf16[32,384], index: 0, kind: input, shape index: {}]
  %s1 = inlined_call_operand.vmem [shape: bf16[384,128], index: 1, kind: input, shape index: {}]
  %s2 = inlined_call_operand.vmem [shape: f32[1,128], index: 2, kind: input, shape index: {}]
  %s3 = inlined_call_operand.hbm [shape: f32[32,128], index: 3, kind: output, shape index: {}]
  %s4 = sld [smem:[#allocation0]]
  $region45: #{_patchify_impl.1} parent=0
    _
  %s6 = ssub.s32 1, %s4
  %s7 = scalar_select 0, %s6, %s4
  $region1: #{_patchify_impl.1} parent=0
    #allocation2 [shape = 'u8[16384]{0}', space=vmem, size = 0x4000, scoped, tag = 'output window, operand 0']
    #allocation3 [shape = 's32[2]{0}', space=sflag, size = 0x8, scoped, tag = 'scoped memory for _patchify_impl.1']
    %8 = vsyncpa [#allocation3], 0
    %s9 = scalar_lea.sflag [#allocation3], 1
    %10 = vsyncpa %s9, 0
    loop: start=0, step=1, limit=4
    $region2: #{_patchify_impl.1} parent=1 // loop_pre_header
      _
    $region3: #{_patchify_impl.1} parent=1 // loop_header
      %s12 = sphi 0, %s16
      %p13 = scmp.ge.s32.totalorder %s12, 4
      %s22 = sphi 0, %s24
      %s25 = sphi 0, %s22
      %s26 = sphi 0, %s25
      %s42 = sphi 0, %s26
      %s46 = sphi 0, %s46
      %s48 = sphi 0, %s46
      %s49 = sphi 0, %s48
      %s63 = sphi 0, %s49
      %s67 = sphi 0, %s67
      %s69 = sphi 0, %s67
      %s70 = sphi 0, %s69
      %s84 = sphi 0, %s70
      %s90 = sphi 0, %s92
      %s93 = sphi 0, %s90
      %s94 = sphi 0, %s93
      %s110 = sphi 0, %s94
    $region4: #{_patchify_impl.1} parent=1 // loop_header_branch
      %15 = sbr.rel (%p13) target = $region8
    $region5: #{_patchify_impl.1} parent=1 // loop_body
      %s17 = ssub.s32 %s12, 1
      %s18 = ssub.s32 %s12, 2
      %s19 = sadd.s32 %s12, 1
      %s20 = ssub.s32 %s12, %s19
      %p21 = scmp.eq.s32.totalorder %s20, 0
      %s23 = sadd.s32 %s22, 1
      %s24 = scalar_select %p21, %s22, %s23
      %p27 = pneg %p21
      %p28 = scmp.eq.s32.totalorder %s12, 1
      %p29 = por %p27, %p28
      %p30 = scmp.ne.s32.totalorder %s22, %s25
      %p31 = scmp.eq.s32.totalorder %s12, 0
      %p32 = por %p30, %p31
      %p33 = scmp.ne.s32.totalorder %s22, %s25
      %p34 = scmp.eq.s32.totalorder %s17, 1
      %p35 = por %p33, %p34
      %p36 = scmp.ne.s32.totalorder %s25, %s26
      %p37 = scmp.eq.s32.totalorder %s17, 0
      %p38 = por %p36, %p37
      %p39 = scmp.ne.s32.totalorder %s25, %s26
      %p40 = scmp.eq.s32.totalorder %s18, 1
      %p41 = por %p39, %p40
      %p43 = scmp.ne.s32.totalorder %s26, %s42
      %p44 = scmp.eq.s32.totalorder %s18, 0
      %p45 = por %p43, %p44
      %s47 = sadd.s32 %s46, 1
      %p50 = scmp.eq.s32.totalorder %s12, 1
      %p51 = scmp.ne.s32.totalorder %s46, %s48
      %p52 = scmp.eq.s32.totalorder %s12, 0
      %p53 = por %p51, %p52
      %p54 = scmp.ne.s32.totalorder %s46, %s48
      %p55 = scmp.eq.s32.totalorder %s17, 1
      %p56 = por %p54, %p55
      %p57 = scmp.ne.s32.totalorder %s48, %s49
      %p58 = scmp.eq.s32.totalorder %s17, 0
      %p59 = por %p57, %p58
      %p60 = scmp.ne.s32.totalorder %s48, %s49
      %p61 = scmp.eq.s32.totalorder %s18, 1
      %p62 = por %p60, %p61
      %p64 = scmp.ne.s32.totalorder %s49, %s63
      %p65 = scmp.eq.s32.totalorder %s18, 0
      %p66 = por %p64, %p65
      %s68 = sadd.s32 %s67, 1
      %p71 = scmp.eq.s32.totalorder %s12, 1
      %p72 = scmp.ne.s32.totalorder %s67, %s69
      %p73 = scmp.eq.s32.totalorder %s12, 0
      %p74 = por %p72, %p73
      %p75 = scmp.ne.s32.totalorder %s67, %s69
      %p76 = scmp.eq.s32.totalorder %s17, 1
      %p77 = por %p75, %p76
      %p78 = scmp.ne.s32.totalorder %s69, %s70
      %p79 = scmp.eq.s32.totalorder %s17, 0
      %p80 = por %p78, %p79
      %p81 = scmp.ne.s32.totalorder %s69, %s70
      %p82 = scmp.eq.s32.totalorder %s18, 1
      %p83 = por %p81, %p82
      %p85 = scmp.ne.s32.totalorder %s70, %s84
      %p86 = scmp.eq.s32.totalorder %s18, 0
      %p87 = por %p85, %p86
      %s88 = ssub.s32 %s12, %s19
      %p89 = scmp.eq.s32.totalorder %s88, 0
      %s91 = sadd.s32 %s90, 1
      %s92 = scalar_select %p89, %s90, %s91
      %p95 = pneg %p89
      %p96 = scmp.eq.s32.totalorder %s12, 1
      %p97 = por %p95, %p96
      %p98 = scmp.ne.s32.totalorder %s90, %s93
      %p99 = scmp.eq.s32.totalorder %s12, 0
      %p100 = por %p98, %p99
      %p101 = scmp.ne.s32.totalorder %s90, %s93
      %p102 = scmp.eq.s32.totalorder %s17, 1
      %p103 = por %p101, %p102
      %p104 = scmp.ne.s32.totalorder %s93, %s94
      %p105 = scmp.eq.s32.totalorder %s17, 0
      %p106 = por %p104, %p105
      %p107 = scmp.ne.s32.totalorder %s93, %s94
      %p108 = scmp.eq.s32.totalorder %s18, 1
      %p109 = por %p107, %p108
      %p111 = scmp.ne.s32.totalorder %s94, %s110
      %p112 = scmp.eq.s32.totalorder %s18, 0
      %p113 = por %p111, %p112
      %p114 = scmp.le.s32.totalorder 1, %s12
      %p115 = scmp.lt.s32.totalorder %s12, 3
      %p116 = pnand %p114, %p115
      %p117 = pneg %p116
      // Predicated region
      $region9: #{_patchify_impl.1} parent=5 // pred_check
        _
      $region10: #{_patchify_impl.1} parent=5 // pred_check_branch
        %119 = sbr.rel (%p116) target = $region12
      $region11: #{_patchify_impl.1} parent=5 // pred_region
        %s120 = ssub.s32 %s12, 1
        // Predicated region
        $region13: #{_patchify_impl.1} parent=11 // pred_check
          %p121 = pneg %p59
        $region14: #{_patchify_impl.1} parent=11 // pred_check_branch
          %123 = sbr.rel (%p121) target = $region16
        $region15: #{_patchify_impl.1} parent=11 // pred_region
          _
        $region16: #{_patchify_impl.1} parent=11 // pred_fallthru
          _
        // Predicated region
        $region17: #{_patchify_impl.1} parent=11 // pred_check
          %p124 = pneg %p80
        $region18: #{_patchify_impl.1} parent=11 // pred_check_branch
          %126 = sbr.rel (%p124) target = $region20
        $region19: #{_patchify_impl.1} parent=11 // pred_region
          _
        $region20: #{_patchify_impl.1} parent=11 // pred_fallthru
          _
      $region12: #{_patchify_impl.1} parent=5 // pred_fallthru
        _
      %p127 = scmp.lt.s32.totalorder %s12, 2
      // Predicated region
      $region21: #{_patchify_impl.1} parent=5 // pred_check
        %p128 = pneg %p127
      $region22: #{_patchify_impl.1} parent=5 // pred_check_branch
        %130 = sbr.rel (%p128) target = $region24
      $region23: #{_patchify_impl.1} parent=5 // pred_region
        // Predicated region
        $region25: #{_patchify_impl.1} parent=23 // pred_check
          %p131 = pneg %p32
        $region26: #{_patchify_impl.1} parent=23 // pred_check_branch
          %133 = sbr.rel (%p131) target = $region28
        $region27: #{_patchify_impl.1} parent=23 // pred_region
          %s134 = smul.u32 2, %s12
          %p135 = scmp.lt.s32.totalorder %s134, 3
          %s136 = scalar_select %p135, %s134, 3
          %s137 = smul.addr %s136, 3
          %s138 = smul.addr %s137, 4
          %s139 = scalar_lea.vmem %s0, %s138
          %s140 = smul.u32 2, %s12
        $region28: #{_patchify_impl.1} parent=23 // pred_fallthru
          _
      $region24: #{_patchify_impl.1} parent=5 // pred_fallthru
        _
      %p141 = scmp.le.s32.totalorder 1, %s12
      %p142 = scmp.lt.s32.totalorder %s12, 3
      %p143 = pnand %p141, %p142
      %p144 = pneg %p143
      // Predicated region
      $region29: #{_patchify_impl.1} parent=5 // pred_check
        _
      $region30: #{_patchify_impl.1} parent=5 // pred_check_branch
        %146 = sbr.rel (%p143) target = $region32
      $region31: #{_patchify_impl.1} parent=5 // pred_region
        %s147 = ssub.s32 %s12, 1
        %s148 = smul.u32 2, %s17
        %p149 = scmp.lt.s32.totalorder %s148, 3
        %s150 = scalar_select %p149, %s148, 3
        %s151 = smul.addr %s150, 3
        %s152 = smul.addr %s151, 4
        %s153 = scalar_lea.vmem %s0, %s152
        %p154 = pneg %p38
        %p155 = pneg %p35
        %p156 = pneg %p59
        %p157 = pneg %p56
        %p158 = pneg %p80
        %p159 = pneg %p77
        %p160 = pneg %p106
        %p161 = pneg %p103
        %s162 = sand.u32 %s93, 1
        %s163 = scalar_lea.sflag [#allocation3], %s162
        %s164 = sand.u32 %s93, 1
        %s165 = smul.addr %s164, 16
        %s166 = scalar_lea.vmem [#allocation2], %s165
        %s167 = smul.u32 2, %s17
        %p168 = scmp.lt.s32.totalorder %s167, 3
        %s169 = scalar_select %p168, %s167, 3
        %s170 = smul.addr %s169, 3
        %s171 = smul.addr %s170, 4
        %s172 = scalar_lea.vmem %s0, %s171
        %s173 = smul.u32 2, %s17
        %s174 = smul.u32 2, %s17
        %v175 = vld [vmem:[%s172] sm:$0xff]
        %v176 = vld [vmem:[%s172 + $0x8] sm:$0xf]
        %v177 = vld [vmem:[%s172 + $0xc] sm:$0xff]
        %v178 = vld [vmem:[%s172 + $0x14] sm:$0xf]
        %v179 = vld [vmem:[%s1] sm:$0xf]
        %v180 = vld [vmem:[%s1 + $0x4] sm:$0xf]
        %v181 = vld [vmem:[%s1 + $0x8] sm:$0xf]
        %v182 = vld [vmem:[%s1 + $0xc] sm:$0xf]
        %v183 = vld [vmem:[%s1 + $0x10] sm:$0xf]
        %v184 = vld [vmem:[%s1 + $0x14] sm:$0xf]
        %v185 = vld [vmem:[%s1 + $0x18] sm:$0xf]
        %v186 = vld [vmem:[%s1 + $0x1c] sm:$0xf]
        %v187 = vld [vmem:[%s1 + $0x20] sm:$0xf]
        %v188 = vld [vmem:[%s1 + $0x24] sm:$0xf]
        %v189 = vld [vmem:[%s1 + $0x28] sm:$0xf]
        %v190 = vld [vmem:[%s1 + $0x2c] sm:$0xf]
        %v191 = vld [vmem:[%s1 + $0x30] sm:$0xf]
        %v192 = vld [vmem:[%s1 + $0x34] sm:$0xf]
        %v193 = vld [vmem:[%s1 + $0x38] sm:$0xf]
        %v194 = vld [vmem:[%s1 + $0x3c] sm:$0xf]
        %v195 = vld [vmem:[%s1 + $0x40] sm:$0xf]
        %v196 = vld [vmem:[%s1 + $0x44] sm:$0xf]
        %v197 = vld [vmem:[%s1 + $0x48] sm:$0xf]
        %v198 = vld [vmem:[%s1 + $0x4c] sm:$0xf]
        %v199 = vld [vmem:[%s1 + $0x50] sm:$0xf]
        %v200 = vld [vmem:[%s1 + $0x54] sm:$0xf]
        %v201 = vld [vmem:[%s1 + $0x58] sm:$0xf]
        %v202 = vld [vmem:[%s1 + $0x5c] sm:$0xf]
        %v203 = vld [vmem:[%s1 + $0x60] sm:$0xf]
        %v204 = vld [vmem:[%s1 + $0x64] sm:$0xf]
        %v205 = vld [vmem:[%s1 + $0x68] sm:$0xf]
        %v206 = vld [vmem:[%s1 + $0x6c] sm:$0xf]
        %v207 = vld [vmem:[%s1 + $0x70] sm:$0xf]
        %v208 = vld [vmem:[%s1 + $0x74] sm:$0xf]
        %v209 = vld [vmem:[%s1 + $0x78] sm:$0xf]
        %v210 = vld [vmem:[%s1 + $0x7c] sm:$0xf]
        %v211 = vld [vmem:[%s1 + $0x80] sm:$0xf]
        %v212 = vld [vmem:[%s1 + $0x84] sm:$0xf]
        %v213 = vld [vmem:[%s1 + $0x88] sm:$0xf]
        %v214 = vld [vmem:[%s1 + $0x8c] sm:$0xf]
        %v215 = vld [vmem:[%s1 + $0x90] sm:$0xf]
        %v216 = vld [vmem:[%s1 + $0x94] sm:$0xf]
        %v217 = vld [vmem:[%s1 + $0x98] sm:$0xf]
        %v218 = vld [vmem:[%s1 + $0x9c] sm:$0xf]
        %v219 = vld [vmem:[%s1 + $0xa0] sm:$0xf]
        %v220 = vld [vmem:[%s1 + $0xa4] sm:$0xf]
        %v221 = vld [vmem:[%s1 + $0xa8] sm:$0xf]
        %v222 = vld [vmem:[%s1 + $0xac] sm:$0xf]
        %v223 = vld [vmem:[%s1 + $0xb0] sm:$0xf]
        %v224 = vld [vmem:[%s1 + $0xb4] sm:$0xf]
        %v225 = vld [vmem:[%s1 + $0xb8] sm:$0xf]
        %v226 = vld [vmem:[%s1 + $0xbc] sm:$0xf]
        %v227 = vld [vmem:[%s2] sm:$0x1]
        %v229 = vperm.slane %v227, 0
        %v235 = vunpack.c.l.b16 %v175
        %v236 = vunpack.c.h.b16 %v175
        %v237 = vunpack.c.l.b16 %v176
        %v238 = vunpack.c.l.b16 %v177
        %v239 = vunpack.c.h.b16 %v177
        %v240 = vunpack.c.l.b16 %v178
        %v241 = vpack.c.b16 %v238, %v235
        %v242 = vpack.c.b16 %v239, %v236
        %v243 = vpack.c.b16 %v240, %v237
        %v295 = vunpack.c.l.b16 %v179
        %v296 = vunpack.c.l.b16 %v180
        %v297 = vunpack.c.l.b16 %v181
        %v298 = vunpack.c.l.b16 %v182
        %v299 = vunpack.c.l.b16 %v183
        %v300 = vunpack.c.l.b16 %v184
        %v301 = vunpack.c.l.b16 %v185
        %v302 = vunpack.c.l.b16 %v186
        %v303 = vunpack.c.l.b16 %v187
        %v304 = vunpack.c.l.b16 %v188
        %v305 = vunpack.c.l.b16 %v189
        %v306 = vunpack.c.l.b16 %v190
        %v307 = vunpack.c.l.b16 %v191
        %v308 = vunpack.c.l.b16 %v192
        %v309 = vunpack.c.l.b16 %v193
        %v310 = vunpack.c.l.b16 %v194
        %v311 = vunpack.c.l.b16 %v195
        %v312 = vunpack.c.l.b16 %v196
        %v313 = vunpack.c.l.b16 %v197
        %v314 = vunpack.c.l.b16 %v198
        %v315 = vunpack.c.l.b16 %v199
        %v316 = vunpack.c.l.b16 %v200
        %v317 = vunpack.c.l.b16 %v201
        %v318 = vunpack.c.l.b16 %v202
        %v319 = vunpack.c.l.b16 %v203
        %v320 = vunpack.c.l.b16 %v204
        %v321 = vunpack.c.l.b16 %v205
        %v322 = vunpack.c.l.b16 %v206
        %v323 = vunpack.c.l.b16 %v207
        %v324 = vunpack.c.l.b16 %v208
        %v325 = vunpack.c.l.b16 %v209
        %v326 = vunpack.c.l.b16 %v210
        %v327 = vunpack.c.l.b16 %v211
        %v328 = vunpack.c.l.b16 %v212
        %v329 = vunpack.c.l.b16 %v213
        %v330 = vunpack.c.l.b16 %v214
        %v331 = vunpack.c.l.b16 %v215
        %v332 = vunpack.c.l.b16 %v216
        %v333 = vunpack.c.l.b16 %v217
        %v334 = vunpack.c.l.b16 %v218
        %v335 = vunpack.c.l.b16 %v219
        %v336 = vunpack.c.l.b16 %v220
        %v337 = vunpack.c.l.b16 %v221
        %v338 = vunpack.c.l.b16 %v222
        %v339 = vunpack.c.l.b16 %v223
        %v340 = vunpack.c.l.b16 %v224
        %v341 = vunpack.c.l.b16 %v225
        %v342 = vunpack.c.l.b16 %v226
        %v343 = vpack.c.b16 %v296, %v295
        %v344 = vpack.c.b16 %v298, %v297
        %v345 = vpack.c.b16 %v300, %v299
        %v346 = vpack.c.b16 %v302, %v301
        %v347 = vpack.c.b16 %v304, %v303
        %v348 = vpack.c.b16 %v306, %v305
        %v349 = vpack.c.b16 %v308, %v307
        %v350 = vpack.c.b16 %v310, %v309
        %v351 = vpack.c.b16 %v312, %v311
        %v352 = vpack.c.b16 %v314, %v313
        %v353 = vpack.c.b16 %v316, %v315
        %v354 = vpack.c.b16 %v318, %v317
        %v355 = vpack.c.b16 %v320, %v319
        %v356 = vpack.c.b16 %v322, %v321
        %v357 = vpack.c.b16 %v324, %v323
        %v358 = vpack.c.b16 %v326, %v325
        %v359 = vpack.c.b16 %v328, %v327
        %v360 = vpack.c.b16 %v330, %v329
        %v361 = vpack.c.b16 %v332, %v331
        %v362 = vpack.c.b16 %v334, %v333
        %v363 = vpack.c.b16 %v336, %v335
        %v364 = vpack.c.b16 %v338, %v337
        %v365 = vpack.c.b16 %v340, %v339
        %v366 = vpack.c.b16 %v342, %v341
        %391 = vmatpush.bf16.msra.mxu0 %v350
        %392 = vmatpush.bf16.msra.mxu0 %v349
        %393 = vmatpush.bf16.msra.mxu0 %v348
        %394 = vmatpush.bf16.msra.mxu0 %v347
        %395 = vmatpush.bf16.msra.mxu0 %v346
        %396 = vmatpush.bf16.msra.mxu0 %v345
        %397 = vmatpush.bf16.msra.mxu0 %v344
        %398 = vmatpush.bf16.msra.mxu0 %v343
        %399 = vmatmul.bf16.gmra.mxu0 %v241
        %v400 = vpop.f32.mrf.mxu0
        %v401 = vadd.f32 %v229, %v400
        %v402 = vpop.f32.mrf.mxu0
        %v403 = vadd.f32 %v229, %v402
        %404 = vdwg.mxu0
        %405 = vmatpush.bf16.msra.mxu0 %v358
        %406 = vmatpush.bf16.msra.mxu0 %v357
        %407 = vmatpush.bf16.msra.mxu0 %v356
        %408 = vmatpush.bf16.msra.mxu0 %v355
        %409 = vmatpush.bf16.msra.mxu0 %v354
        %410 = vmatpush.bf16.msra.mxu0 %v353
        %411 = vmatpush.bf16.msra.mxu0 %v352
        %412 = vmatpush.bf16.msra.mxu0 %v351
        %413 = vmatmul.bf16.gmra.mxu0 %v242
        %v414 = vpop.f32.mrf.mxu0
        %v415 = vadd.f32 %v401, %v414
        %v416 = vpop.f32.mrf.mxu0
        %v417 = vadd.f32 %v403, %v416
        %418 = vdwg.mxu0
        %419 = vmatpush.bf16.msra.mxu0 %v366
        %420 = vmatpush.bf16.msra.mxu0 %v365
        %421 = vmatpush.bf16.msra.mxu0 %v364
        %422 = vmatpush.bf16.msra.mxu0 %v363
        %423 = vmatpush.bf16.msra.mxu0 %v362
        %424 = vmatpush.bf16.msra.mxu0 %v361
        %425 = vmatpush.bf16.msra.mxu0 %v360
        %426 = vmatpush.bf16.msra.mxu0 %v359
        %427 = vmatmul.bf16.gmra.mxu0 %v243
        %v428 = vpop.f32.mrf.mxu0
        %v429 = vadd.f32 %v415, %v428
        %v430 = vpop.f32.mrf.mxu0
        %v431 = vadd.f32 %v417, %v430
        %432 = vdwg.mxu0
        %433 = vst [vmem:[%s166] sm:$0xff] %v429
        %434 = vst [vmem:[%s166 + $0x8] sm:$0xff] %v431
        %s435 = sand.u32 %s93, 1
        %s436 = scalar_lea.sflag [#allocation3], %s435
        %s437 = sand.u32 %s93, 1
        %s438 = smul.addr %s437, 16
        %s439 = scalar_lea.vmem [#allocation2], %s438
        // Predicated region
        $region33: #{_patchify_impl.1} parent=31 // pred_check
          %p440 = pneg %p103
        $region34: #{_patchify_impl.1} parent=31 // pred_check_branch
          %442 = sbr.rel (%p440) target = $region36
        $region35: #{_patchify_impl.1} parent=31 // pred_region
          %s443 = smul.u32 2, %s17
          %445 = vsyncadd %s436, 0
          %s446 = smul.addr %s443, 8
          %s447 = scalar_lea.hbm %s3, %s446
          %s448 = sshll.u32 %s439, 4
          %s449 = int_to_ptr.vmem [resolvable:$true] %s448
          %s450 = sshll.u32 %s447, 4
          %s451 = int_to_ptr.hbm [resolvable:$true] %s450
          %456 = dma.vmem_to_hbm [thread:$0]  %s449, 256, %s451, %s436, 128, 128, 8
        $region36: #{_patchify_impl.1} parent=31 // pred_fallthru
          _
      $region32: #{_patchify_impl.1} parent=5 // pred_fallthru
        _
      %p457 = scmp.le.s32.totalorder 2, %s12
      // Predicated region
      $region37: #{_patchify_impl.1} parent=5 // pred_check
        %p458 = pneg %p457
      $region38: #{_patchify_impl.1} parent=5 // pred_check_branch
        %460 = sbr.rel (%p458) target = $region40
      $region39: #{_patchify_impl.1} parent=5 // pred_region
        %s461 = ssub.s32 %s12, 2
        // Predicated region
        $region41: #{_patchify_impl.1} parent=39 // pred_check
          %p462 = pneg %p109
        $region42: #{_patchify_impl.1} parent=39 // pred_check_branch
          %464 = sbr.rel (%p462) target = $region44
        $region43: #{_patchify_impl.1} parent=39 // pred_region
          %s465 = sand.u32 %s94, 1
          %s466 = scalar_lea.sflag [#allocation3], %s465
          %s467 = sand.u32 %s94, 1
          %s468 = smul.addr %s467, 16
          %s469 = scalar_lea.vmem [#allocation2], %s468
          %471 = dma.done %s466, 256
        $region44: #{_patchify_impl.1} parent=39 // pred_fallthru
          _
      $region40: #{_patchify_impl.1} parent=5 // pred_fallthru
        _
    $region6: #{_patchify_impl.1} parent=1 // loop_footer
      %s16 = sadd.s32 1, %s12
    $region7: #{_patchify_impl.1} parent=1 // loop_footer_branch
      %11 = sbr.rel target = $region3
    $region8: #{_patchify_impl.1} parent=1 // loop_exit
      _
    %472 = vsyncpa [#allocation3], 1
    %s473 = scalar_lea.sflag [#allocation3], 1
    %474 = vsyncpa %s473, 1

</llo_original>
